<compile_context>
chip_gen: v7x
topology: tpu7x:2x2x1
jax: 0.10.0
libtpu: 0.0.40
codegen_flags: <defaults>
</compile_context>

<pallas_src>
import functools

import jax
import jax.numpy as jnp
from jax import lax
from jax.experimental import pallas as pl
from jax.experimental.pallas import tpu as pltpu


def _encoder_avg_resident_kernel(tok_ref, w_ref, table_ref, out_ref, *, seq_len, bt):
    """Fast path: embedding table fully resident in VMEM.

    tok_ref:   (Bp, S) int32  SMEM   token ids (batch-major)
    w_ref:     (Bp, S) f32    SMEM   per-token weights (normalization folded in)
    table_ref: (V, H)  f32    VMEM   whole embedding table (single copy)
    out_ref:   (bt, H) f32    VMEM   output block for this batch tile
    """
    i = pl.program_id(0)
    b0 = i * bt
    h = table_ref.shape[1]

    def body(s, acc):
        # bt weighted rows, gathered with dynamic sublane slices, merged into
        # one (bt, H) tile and accumulated in the loop carry (stays in vregs).
        rows = [
            w_ref[b0 + r, s] * table_ref[pl.ds(tok_ref[b0 + r, s], 1), :]
            for r in range(bt)
        ]
        return acc + jnp.concatenate(rows, axis=0)

    out_ref[...] = lax.fori_loop(0, seq_len, body, jnp.zeros((bt, h), jnp.float32))


def _encoder_avg_gather_kernel(tok_ref, w_ref, table_ref, out_ref, buf, sems,
                               *, seq_len, bt):
    """General path: table stays in HBM; rows are DMA-gathered with manual
    double buffering across sequence positions (P4 pattern).

    tok_ref:   (Bp, S) int32 SMEM
    w_ref:     (Bp, S) f32   SMEM
    table_ref: (V, H)        HBM (memory_space=pl.ANY)
    out_ref:   (bt, H) f32   VMEM
    buf:       (2, bt, H)    VMEM scratch (double buffer of gathered rows)
    sems:      (2, bt)       DMA semaphores (one per in-flight row copy)
    """
    i = pl.program_id(0)
    b0 = i * bt
    h = out_ref.shape[-1]

    def fetch(s, slot):
        for r in range(bt):
            pltpu.make_async_copy(
                table_ref.at[pl.ds(tok_ref[b0 + r, s], 1), :],   # (1, H) row in HBM
                buf.at[slot, pl.ds(r, 1), :],                    # (1, H) row in VMEM
                sems.at[slot, r],
            ).start()

    def wait(slot):
        for r in range(bt):
            pltpu.make_async_copy(
                table_ref.at[pl.ds(0, 1), :],                    # shape-matching desc
                buf.at[slot, pl.ds(r, 1), :],
                sems.at[slot, r],
            ).wait()

    # Prime slot 0 with the rows for sequence position 0.
    fetch(0, 0)

    def body(s, acc):
        slot = lax.rem(s, 2)
        wait(slot)

        # Prefetch next position's rows into the other buffer while we MAC.
        @pl.when(s + 1 < seq_len)
        def _prefetch():
            fetch(s + 1, 1 - slot)

        # (bt, 1) column of per-row weights built from SMEM scalars.
        wcol = jnp.concatenate(
            [jnp.full((1, 1), w_ref[b0 + r, s], jnp.float32) for r in range(bt)],
            axis=0)
        return acc + wcol * buf[slot].astype(jnp.float32)

    out_ref[...] = lax.fori_loop(0, seq_len, body, jnp.zeros((bt, h), jnp.float32))


def encoder_avg(input_seq, input_mask, emb_table, *, tonorm=True, batch_tile=8,
                table_vmem_budget_bytes=16 * 1024 * 1024):
    """Pallas implementation of EncoderAvg.forward.

    input_seq:  (S, B) int32 token ids
    input_mask: (S, B) 0/1 mask
    emb_table:  (V, H) float32 embedding weights
    returns:    (B, H) float32
    """
    S, B = input_seq.shape
    V, H = emb_table.shape

    # Batch-major; clamp ids so no out-of-range gather/DMA can ever be issued.
    tokens = jnp.clip(jnp.transpose(input_seq).astype(jnp.int32), 0, V - 1)  # (B, S)
    w = jnp.transpose(input_mask).astype(jnp.float32)                        # (B, S)
    if tonorm:
        # Fold the normalization into the per-token weights (review: drop the
        # in-kernel denominator).  Exact for 0/1 masks; all-zero mask rows
        # still yield nan, matching torch semantics.
        w = w / jnp.sum(w, axis=1, keepdims=True)
    table = emb_table.astype(jnp.float32)

    # Batch tile: 8 rows (sublane-dense output) when possible, otherwise the
    # full (small) batch so the block equals the array extent.
    bt = max(1, min(batch_tile, B))
    pad = (-B) % bt
    if pad:
        tokens = jnp.pad(tokens, ((0, pad), (0, 0)))
        w = jnp.pad(w, ((0, pad), (0, 0)))          # zero weights -> no contribution
    Bp = B + pad
    grid = (Bp // bt,)                              # parallel axis (megacore on v7x)

    table_bytes = V * H * table.dtype.itemsize
    resident = table_bytes <= table_vmem_budget_bytes

    common_in_specs = [
        pl.BlockSpec(memory_space=pltpu.MemorySpace.SMEM),   # token ids
        pl.BlockSpec(memory_space=pltpu.MemorySpace.SMEM),   # weights
    ]
    out_spec = pl.BlockSpec((bt, H), lambda i: (i, 0))
    out_shape = jax.ShapeDtypeStruct((Bp, H), jnp.float32)

    if resident:
        kernel = functools.partial(_encoder_avg_resident_kernel, seq_len=S, bt=bt)
        in_specs = common_in_specs + [
            pl.BlockSpec(memory_space=pltpu.MemorySpace.VMEM)  # whole table, one copy
        ]
        scratch_shapes = []
        vmem_limit = table_bytes + 8 * 1024 * 1024
    else:
        kernel = functools.partial(_encoder_avg_gather_kernel, seq_len=S, bt=bt)
        in_specs = common_in_specs + [
            pl.BlockSpec(memory_space=pl.ANY)                  # table stays in HBM
        ]
        scratch_shapes = [
            pltpu.VMEM((2, bt, H), table.dtype),               # row double buffer
            pltpu.SemaphoreType.DMA((2, bt)),
        ]
        vmem_limit = 16 * 1024 * 1024

    out = pl.pallas_call(
        kernel,
        out_shape=out_shape,
        grid=grid,
        in_specs=in_specs,
        out_specs=out_spec,
        scratch_shapes=scratch_shapes,
        compiler_params=pltpu.CompilerParams(
            dimension_semantics=("parallel",),
            vmem_limit_bytes=vmem_limit,
        ),
    )(tokens, w, table)

    return out[:B]


def encoder_avg_reference(input_seq, input_mask, emb_table, *, tonorm=True):
    """Plain-JAX reference matching the PyTorch module semantics."""
    emb = emb_table[input_seq]                       # (S, B, H)
    w = input_mask.astype(jnp.float32)
    y = (emb * w[..., None]).sum(axis=0)             # (B, H)
    if tonorm:
        y = y / w.sum(axis=0)[:, None]
    return y


if __name__ == "__main__":
    # H chosen as a multiple of 128 so every block is lane-dense.
    S, B, V, H = 8, 2, 16, 128

    key = jax.random.PRNGKey(0)
    k_seq, k_mask, k_emb = jax.random.split(key, 3)

    input_seq = jax.random.randint(k_seq, (S, B), 0, V, dtype=jnp.int32)
    input_mask = jax.random.bernoulli(k_mask, 0.7, (S, B)).astype(jnp.float32)
    # Guarantee non-zero denominator per batch element (as real padding masks do).
    input_mask = input_mask.at[0, :].set(1.0)

    # Deterministic synthetic embedding weights (nn.Embedding(V, H)).
    emb_table = jax.random.normal(k_emb, (V, H), dtype=jnp.float32) * 0.02

    ref = encoder_avg_reference(input_seq, input_mask, emb_table, tonorm=True)

    # Fast path: table resident in VMEM (fits on v5e/v6e/v7x budgets).
    out_res = jax.block_until_ready(
        encoder_avg(input_seq, input_mask, emb_table, tonorm=True))
    assert out_res.shape == (B, H) and out_res.dtype == jnp.float32
    assert jnp.allclose(out_res, ref, atol=1e-5, rtol=1e-5), "resident path mismatch"

    # General path: table in HBM, manually double-buffered row-gather DMAs.
    out_gat = jax.block_until_ready(
        encoder_avg(input_seq, input_mask, emb_table, tonorm=True,
                    table_vmem_budget_bytes=0))
    assert out_gat.shape == (B, H) and out_gat.dtype == jnp.float32
    assert jnp.allclose(out_gat, ref, atol=1e-5, rtol=1e-5), "gather path mismatch"

    print("KERNEL_OK")
</pallas_src>

<mosaic_0001>
module attributes {stable_mosaic.version = 11 : i64} {
  func.func @_encoder_avg_resident_kernel(%arg0: i32, %arg1: memref<2x8xi32, #tpu.memory_space<smem>>, %arg2: memref<2x8xf32, #tpu.memory_space<smem>>, %arg3: memref<16x128xf32, #tpu.memory_space<vmem>>, %arg4: memref<2x128xf32, #tpu.memory_space<vmem>>) attributes {dimension_semantics = [#tpu.dimension_semantics<parallel>], iteration_bounds = array<i64: 1>, scalar_prefetch = 0 : i64, scratch_operands = 0 : i64, tpu.core_type = #tpu.core_type<tc>, window_params = [{transform_indices = @transform_0, window_bounds = array<i64: 2, 8>}, {transform_indices = @transform_1, window_bounds = array<i64: 2, 8>}, {pipeline_mode = #tpu.pipeline_mode<synchronous>, transform_indices = @transform_2, window_bounds = array<i64: 16, 128>}, {transform_indices = @transform_3, window_bounds = array<i64: 2, 128>}]} {
    %c2_i32 = arith.constant 2 : i32
    %0 = arith.muli %arg0, %c2_i32 : i32
    %cst = arith.constant 0.000000e+00 : f32
    %1 = vector.broadcast %cst : f32 to vector<2x128xf32>
    %c0_i32 = arith.constant 0 : i32
    %c8_i32 = arith.constant 8 : i32
    %2 = arith.addi %c0_i32, %c8_i32 : i32
    %c1_i32 = arith.constant 1 : i32
    %3 = scf.for %arg5 = %c0_i32 to %2 step %c1_i32 iter_args(%arg6 = %1) -> (vector<2x128xf32>)  : i32 {
      %c0_i32_2 = arith.constant 0 : i32
      %5 = arith.addi %0, %c0_i32_2 : i32
      %6 = arith.index_cast %5 : i32 to index
      %7 = arith.index_cast %arg5 : i32 to index
      %8 = memref.load %arg2[%6, %7] : memref<2x8xf32, #tpu.memory_space<smem>>
      %c0_i32_3 = arith.constant 0 : i32
      %9 = arith.addi %0, %c0_i32_3 : i32
      %10 = arith.index_cast %9 : i32 to index
      %11 = arith.index_cast %arg5 : i32 to index
      %12 = memref.load %arg1[%10, %11] : memref<2x8xi32, #tpu.memory_space<smem>>
      %13 = arith.index_cast %12 : i32 to index
      %c0_4 = arith.constant 0 : index
      %14 = vector.load %arg3[%13, %c0_4] : memref<16x128xf32, #tpu.memory_space<vmem>>, vector<1x128xf32>
      %15 = vector.broadcast %8 : f32 to vector<1x128xf32>
      %16 = arith.mulf %15, %14 : vector<1x128xf32>
      %c1_i32_5 = arith.constant 1 : i32
      %17 = arith.addi %0, %c1_i32_5 : i32
      %18 = arith.index_cast %17 : i32 to index
      %19 = arith.index_cast %arg5 : i32 to index
      %20 = memref.load %arg2[%18, %19] : memref<2x8xf32, #tpu.memory_space<smem>>
      %c1_i32_6 = arith.constant 1 : i32
      %21 = arith.addi %0, %c1_i32_6 : i32
      %22 = arith.index_cast %21 : i32 to index
      %23 = arith.index_cast %arg5 : i32 to index
      %24 = memref.load %arg1[%22, %23] : memref<2x8xi32, #tpu.memory_space<smem>>
      %25 = arith.index_cast %24 : i32 to index
      %c0_7 = arith.constant 0 : index
      %26 = vector.load %arg3[%25, %c0_7] : memref<16x128xf32, #tpu.memory_space<vmem>>, vector<1x128xf32>
      %27 = vector.broadcast %20 : f32 to vector<1x128xf32>
      %28 = arith.mulf %27, %26 : vector<1x128xf32>
      %29 = tpu.concatenate %16, %28 in 0 : vector<1x128xf32>, vector<1x128xf32> -> vector<2x128xf32>
      %30 = arith.addf %arg6, %29 : vector<2x128xf32>
      scf.yield %30 : vector<2x128xf32>
    }
    %c8_i32_0 = arith.constant 8 : i32
    %c0 = arith.constant 0 : index
    %c0_1 = arith.constant 0 : index
    %4 = vector.load %arg4[%c0, %c0_1] : memref<2x128xf32, #tpu.memory_space<vmem>>, vector<2x128xf32>
    tpu.vector_store %arg4[%c0, %c0_1], %3 {strides = array<i32>} : memref<2x128xf32, #tpu.memory_space<vmem>>, vector<2x128xf32>,
    return
  }
  func.func @transform_0(%arg0: i32) -> (i32, i32) {
    %c0_i32 = arith.constant 0 : i32
    %c0_i32_0 = arith.constant 0 : i32
    %c0_i32_1 = arith.constant 0 : i32
    return %c0_i32, %c0_i32_0 : i32, i32
  }
  func.func @transform_1(%arg0: i32) -> (i32, i32) {
    %c0_i32 = arith.constant 0 : i32
    %c0_i32_0 = arith.constant 0 : i32
    %c0_i32_1 = arith.constant 0 : i32
    return %c0_i32, %c0_i32_0 : i32, i32
  }
  func.func @transform_2(%arg0: i32) -> (i32, i32) {
    %c0_i32 = arith.constant 0 : i32
    %c0_i32_0 = arith.constant 0 : i32
    %c0_i32_1 = arith.constant 0 : i32
    return %c0_i32, %c0_i32_0 : i32, i32
  }
  func.func @transform_3(%arg0: i32) -> (i32, i32) {
    %c0_i32 = arith.constant 0 : i32
    %c0_i32_0 = arith.constant 0 : i32
    return %arg0, %c0_i32 : i32, i32
  }
}

</mosaic_0001>

<llo_original>
// kernel: tpu_custom_call.1
$region0: #{tpu_custom_call.1}
  #allocation0 [shape = 'u32[]', space=smem, size = 0x4, offset = 0x4, fixed_abs, tag = 'smem constant byte address 0x4 - core index']
  #allocation1 [shape = 'u32[144,128]{1,0:T(1,128)}', space=vmem, size = 0x12000, scoped, tag = 'internal scratch']
  %s0 = inlined_call_operand.hbm [shape: s32[2,8], index: 0, kind: input, shape index: {}]
  %s1 = inlined_call_operand.vmem [shape: f32[2,8], index: 1, kind: input, shape index: {}]
  %s2 = inlined_call_operand.hbm [shape: f32[16,128], index: 2, kind: input, shape index: {}]
  %s3 = inlined_call_operand.hbm [shape: f32[2,128], index: 3, kind: output, shape index: {}]
  %s4 = sld [smem:[#allocation0]]
  $region41: #{tpu_custom_call.1} parent=0
    _
  %s6 = ssub.s32 1, %s4
  %s7 = scalar_select 0, %s6, %s4
  $region1: #{tpu_custom_call.1} parent=0
    #allocation2 [shape = 'u8[1024]{0}', space=smem, size = 0x400, scoped, tag = 'input window, operand 0, single buffered']
    #allocation3 [shape = 's32[1]{0}', space=sflag, size = 0x4, scoped, tag = 'scoped memory for tpu_custom_call.1']
    #allocation4 [shape = 's32[1]{0}', space=sflag, size = 0x4, scoped, tag = 'scoped memory for tpu_custom_call.1']
    #allocation5 [shape = 's32[1]{0}', space=sflag, size = 0x4, scoped, tag = 'scoped memory for tpu_custom_call.1']
    #allocation6 [shape = 's32[1]{0}', space=sflag, size = 0x4, scoped, tag = 'scoped memory for tpu_custom_call.1']
    #allocation7 [shape = 'u8[1024]{0}', space=smem, size = 0x400, scoped, tag = 'input window, operand 1, single buffered']
    #allocation8 [shape = 'u8[8192]{0}', space=vmem, size = 0x2000, scoped, tag = 'input window, operand 2, single buffered']
    #allocation9 [shape = 'u8[1024]{0}', space=vmem, size = 0x400, scoped, tag = 'output window, operand 0, single buffered']
    %8 = vsyncpa [#allocation5], 0
    %9 = vsyncpa [#allocation6], 0
    %10 = vsyncpa [#allocation3], 0
    %11 = vsyncpa [#allocation4], 0
    // Predicated region
    $region2: #{tpu_custom_call.1} parent=1 // pred_check
      _
    $region3: #{tpu_custom_call.1} parent=1 // pred_check_branch
      %13 = sbr.rel (0) target = $region5
    $region4: #{tpu_custom_call.1} parent=1 // pred_region
      %s15 = ssub.s32 32, 32
      %16 = vsyncadd [#allocation5], %s15
      %19 = dma.hbm_to_smem %s0, 32, [#allocation2], [#allocation5]
    $region5: #{tpu_custom_call.1} parent=1 // pred_fallthru
      _
    // Predicated region
    $region6: #{tpu_custom_call.1} parent=1 // pred_check
      _
    $region7: #{tpu_custom_call.1} parent=1 // pred_check_branch
      %21 = sbr.rel (0) target = $region9
    $region8: #{tpu_custom_call.1} parent=1 // pred_region
      %s23 = ssub.s32 32, 32
      %24 = vsyncadd [#allocation6], %s23
      %s26 = sshll.u32 %s1, 4
      %s27 = int_to_ptr.vmem [resolvable:$true] %s26
      %29 = dma.vmem_to_smem %s27, 32, [#allocation7], [#allocation6]
    $region9: #{tpu_custom_call.1} parent=1 // pred_fallthru
      _
    // Predicated region
    $region10: #{tpu_custom_call.1} parent=1 // pred_check
      _
    $region11: #{tpu_custom_call.1} parent=1 // pred_check_branch
      %31 = sbr.rel (0) target = $region13
    $region12: #{tpu_custom_call.1} parent=1 // pred_region
      %s33 = ssub.s32 256, 256
      %34 = vsyncadd [#allocation3], %s33
      %s35 = sshll.u32 [#allocation8], 4
      %s36 = int_to_ptr.vmem [resolvable:$true] %s35
      %41 = dma.hbm_to_vmem [thread:$0]  %s2, 256, %s36, [#allocation3], 128, 128, 8
    $region13: #{tpu_custom_call.1} parent=1 // pred_fallthru
      _
    // Predicated region
    $region14: #{tpu_custom_call.1} parent=1 // pred_check
      _
    $region15: #{tpu_custom_call.1} parent=1 // pred_check_branch
      %43 = sbr.rel (0) target = $region17
    $region16: #{tpu_custom_call.1} parent=1 // pred_region
      %44 = dma.done [#allocation5], 32
    $region17: #{tpu_custom_call.1} parent=1 // pred_fallthru
      _
    // Predicated region
    $region18: #{tpu_custom_call.1} parent=1 // pred_check
      _
    $region19: #{tpu_custom_call.1} parent=1 // pred_check_branch
      %46 = sbr.rel (0) target = $region21
    $region20: #{tpu_custom_call.1} parent=1 // pred_region
      %47 = dma.done [#allocation6], 32
    $region21: #{tpu_custom_call.1} parent=1 // pred_fallthru
      _
    // Predicated region
    $region22: #{tpu_custom_call.1} parent=1 // pred_check
      _
    $region23: #{tpu_custom_call.1} parent=1 // pred_check_branch
      %49 = sbr.rel (0) target = $region25
    $region24: #{tpu_custom_call.1} parent=1 // pred_region
      %50 = dma.done [#allocation3], 256
    $region25: #{tpu_custom_call.1} parent=1 // pred_fallthru
      _
    %51 = sfence
    %s52 = smul.u32 0, 2
    loop: start=0, step=1, limit=8
    $region26: #{tpu_custom_call.1} parent=1 // loop_pre_header
      _
    $region27: #{tpu_custom_call.1} parent=1 // loop_header
      %s54 = sphi 0, %s58
      %p55 = scmp.ge.s32.totalorder %s54, 8
      %v59 = vphi 0.0, %v88
    $region28: #{tpu_custom_call.1} parent=1 // loop_header_branch
      %57 = sbr.rel (%p55) target = $region32
    $region29: #{tpu_custom_call.1} parent=1 // loop_body
      %s60 = sshra.s32 %s54, 7
      %s61 = sand.u32 %s54, 127
      %s62 = sadd.s32 %s60, %s52
      %s63 = smul.u32 %s62, 128
      %s64 = sshra.s32 %s54, 7
      %s65 = sand.u32 %s54, 127
      %s66 = sadd.s32 %s63, %s65
      %s67 = sld [smem:[#allocation7 + %s66]]
      %s68 = sld [smem:[#allocation2 + %s66]]
      %s69 = scalar_lea.vmem [#allocation8], %s68
      %v70 = vld [vmem:[%s69] sm:$0x1]
      %v71 = vstv %s67
      %v72 = vmul.f32 %v71, %v70
      %s73 = sadd.s32 %s52, 1
      %s74 = sadd.s32 %s60, %s73
      %s75 = smul.u32 %s74, 128
      %s76 = sadd.s32 %s75, %s65
      %s77 = sld [smem:[#allocation7 + %s76]]
      %s78 = sld [smem:[#allocation2 + %s76]]
      %s79 = scalar_lea.vmem [#allocation8], %s78
      %v80 = vld [vmem:[%s79] sm:$0x1]
      %v81 = vstv %s77
      %v82 = vmul.f32 %v81, %v80
      %v84 = vrot.slane %v82, 7
      %vm86 = vcmask 1040384
      %v87 = vsel %vm86, %v72, %v84
      %v88 = vadd.f32 %v59, %v87
    $region30: #{tpu_custom_call.1} parent=1 // loop_footer
      %s58 = sadd.s32 1, %s54
    $region31: #{tpu_custom_call.1} parent=1 // loop_footer_branch
      %53 = sbr.rel target = $region27
    $region32: #{tpu_custom_call.1} parent=1 // loop_exit
      _
    %89 = vst [vmem:[#allocation9] sm:$0x3] %v59
    // Predicated region
    $region33: #{tpu_custom_call.1} parent=1 // pred_check
      _
    $region34: #{tpu_custom_call.1} parent=1 // pred_check_branch
      %91 = sbr.rel (0) target = $region36
    $region35: #{tpu_custom_call.1} parent=1 // pred_region
      %s93 = ssub.s32 32, 32
      %94 = vsyncadd [#allocation4], %s93
      %s96 = sshll.u32 [#allocation9], 4
      %s97 = int_to_ptr.vmem [resolvable:$true] %s96
      %99 = dma.vmem_to_hbm [thread:$0]  %s97, 32, %s3, [#allocation4]
    $region36: #{tpu_custom_call.1} parent=1 // pred_fallthru
      _
    // Predicated region
    $region37: #{tpu_custom_call.1} parent=1 // pred_check
      _
    $region38: #{tpu_custom_call.1} parent=1 // pred_check_branch
      %101 = sbr.rel (0) target = $region40
    $region39: #{tpu_custom_call.1} parent=1 // pred_region
      %102 = dma.done [#allocation4], 32
    $region40: #{tpu_custom_call.1} parent=1 // pred_fallthru
      _
    %103 = vsyncpa [#allocation3], 1
    %104 = vsyncpa [#allocation4], 1
    %105 = vsyncpa [#allocation5], 1
    %106 = vsyncpa [#allocation6], 1

</llo_original>
